<compile_context>
chip_gen: v7x
topology: tpu7x:2x2x1
jax: 0.10.0
libtpu: 0.0.40
codegen_flags: <defaults>
</compile_context>

<pallas_src>
import functools

import jax
import jax.numpy as jnp
from jax.experimental import pallas as pl
from jax.experimental.pallas import tpu as pltpu

LANE = 128


def _round_up(x, m):
    return (x + m - 1) // m * m


def _cdiv(a, b):
    return (a + b - 1) // b


# ----------------------------------------------------------------------------- kernel
def actor_residual_kernel(x_ref, w1pk_ref, b1_ref, w2_ref, b2_ref,
                          w3_ref, b3_ref, w4_ref, b4_ref, out_ref, *, mid_p):
    # MXU operands in bf16 (native rate on v5e/v6e/v7x); accumulate in f32.
    x = x_ref[...].astype(jnp.bfloat16)                               # (TB, state_dim)
    # Fused layer-1 + prior: one MXU pass over concat([w1, priorK]) -> (TB, mid_p+act_p)
    r = jnp.dot(x, w1pk_ref[...], preferred_element_type=jnp.float32)
    # Park the prior term in out_ref right away: keeping a (TB,128) f32 tensor live
    # across 3 matmuls + 4 tanhs would spill; out_ref is VMEM, the re-read is one vld.
    out_ref[...] = r[:, mid_p:].astype(out_ref.dtype)
    # Linear1..3 + Tanh (bias-add / tanh in f32; tanh rides the EUP slot)
    h = jnp.tanh(r[:, :mid_p] + b1_ref[...])
    h = jnp.tanh(jnp.dot(h.astype(jnp.bfloat16), w2_ref[...],
                         preferred_element_type=jnp.float32) + b2_ref[...])
    h = jnp.tanh(jnp.dot(h.astype(jnp.bfloat16), w3_ref[...],
                         preferred_element_type=jnp.float32) + b3_ref[...])
    # Head (plain affine; layer_norm in the PyTorch source is an init helper only)
    a = jnp.dot(h.astype(jnp.bfloat16), w4_ref[...],
                preferred_element_type=jnp.float32) + b4_ref[...]
    # Lane-dense store: out last dim is a full 128-lane slab (padded action dim).
    out_ref[...] = (out_ref[...].astype(jnp.float32) + jnp.tanh(a)).astype(out_ref.dtype)


# ---------------------------------------------------------------------------- wrapper
def prepare_params(params):
    """One-time packing: zero-pad feature dims to 128 lanes, fuse priorK into the
    layer-1 RHS, and cast all weight matrices to bf16 (biases stay f32)."""
    w1, b1 = params["w1"], params["b1"]
    w2, b2 = params["w2"], params["b2"]
    w3, b3 = params["w3"], params["b3"]
    w4, b4 = params["w4"], params["b4"]
    pk = params["priorK"]

    state_dim, mid_dim = w1.shape
    action_dim = w4.shape[1]
    mid_p = _round_up(mid_dim, LANE)
    act_p = _round_up(action_dim, LANE)

    def pad2(a, rows, cols):
        return jnp.pad(a, ((0, rows - a.shape[0]), (0, cols - a.shape[1])))

    w1pk = jnp.concatenate([pad2(w1, state_dim, mid_p),
                            pad2(pk, state_dim, act_p)], axis=1)      # (state_dim, mid_p+act_p)
    packed = (
        w1pk.astype(jnp.bfloat16),
        pad2(b1, 1, mid_p),
        pad2(w2, mid_p, mid_p).astype(jnp.bfloat16), pad2(b2, 1, mid_p),
        pad2(w3, mid_p, mid_p).astype(jnp.bfloat16), pad2(b3, 1, mid_p),
        pad2(w4, mid_p, act_p).astype(jnp.bfloat16), pad2(b4, 1, act_p),
    )
    meta = dict(state_dim=state_dim, mid_p=mid_p, act_p=act_p, action_dim=action_dim)
    return packed, meta


def _choose_batch_tile(B, batch_tile):
    """Pick (tile, n_steps) so the grid divides B nearly evenly (no ~2x junk rows),
    with >= 2 and an even number of steps for B >= 16 so v7x's 2 TCs both get work."""
    n_steps = max(_cdiv(B, batch_tile), 1)
    if B >= 16:
        n_steps = max(n_steps, 2)
        n_steps += n_steps % 2            # balanced across v7x's two TensorCores
    tb = _round_up(_cdiv(B, n_steps), 8)  # sublane-aligned
    return tb, n_steps


def actor_residual_forward(state, packed, meta, *, batch_tile=2048, out_dtype=None):
    B, state_dim = state.shape
    assert state_dim == meta["state_dim"]
    mid_p, act_p, action_dim = meta["mid_p"], meta["act_p"], meta["action_dim"]
    out_dtype = state.dtype if out_dtype is None else out_dtype  # bf16 halves writeback

    tb, n_steps = _choose_batch_tile(B, batch_tile)
    b_pad = tb * n_steps
    x = state if b_pad == B else jnp.pad(state, ((0, b_pad - B), (0, 0)))

    # Weights use a constant block index -> DMAed once, VMEM-resident across the grid.
    # (pipeline_mode=pl.Buffered(1) would drop their redundant second buffer; left at
    #  the default for robustness — a few hundred KiB at these sizes.)
    resident = lambda a: pl.BlockSpec(a.shape, lambda i: (0, 0))

    weight_bytes = sum(int(a.size) * a.dtype.itemsize for a in packed)
    cost = pl.CostEstimate(
        flops=2 * b_pad * (state_dim * (mid_p + act_p) + 2 * mid_p * mid_p + mid_p * act_p),
        transcendentals=b_pad * (3 * mid_p + act_p),
        bytes_accessed=b_pad * state_dim * state.dtype.itemsize
                       + b_pad * act_p * jnp.dtype(out_dtype).itemsize
                       + weight_bytes,
    )

    out = pl.pallas_call(
        functools.partial(actor_residual_kernel, mid_p=mid_p),
        out_shape=jax.ShapeDtypeStruct((b_pad, act_p), out_dtype),
        grid_spec=pltpu.PrefetchScalarGridSpec(
            num_scalar_prefetch=0,
            grid=(n_steps,),
            in_specs=[pl.BlockSpec((tb, state_dim), lambda i: (i, 0))]
                     + [resident(a) for a in packed],
            out_specs=pl.BlockSpec((tb, act_p), lambda i: (i, 0)),
        ),
        compiler_params=pltpu.CompilerParams(
            dimension_semantics=("parallel",),      # shards batch tiles across TCs on v7x
            vmem_limit_bytes=32 * 1024 * 1024),
        cost_estimate=cost,
    )(x, *packed)
    # Production consumers that can handle the padded (b_pad, 128) slab should take it
    # directly (or fuse this slice into the next op) to avoid a second HBM pass.
    return out[:B, :action_dim]


# ------------------------------------------------------------------------ init / ref
def init_params(key, state_dim, mid_dim, action_dim):
    """Deterministic synthetic init mirroring ActorResidualPPO.__init__ shapes.
    nn.Linear weights are stored pre-transposed as (in_dim, out_dim)."""
    ks = jax.random.split(key, 5)

    def lin(kw, fan_in, fan_out, scale):
        return jax.random.normal(kw, (fan_in, fan_out), jnp.float32) * scale

    return {
        "w1": lin(ks[0], state_dim, mid_dim, 1.0 / jnp.sqrt(state_dim)),
        "b1": jnp.zeros((1, mid_dim), jnp.float32),
        "w2": lin(ks[1], mid_dim, mid_dim, 1.0 / jnp.sqrt(mid_dim)),
        "b2": jnp.zeros((1, mid_dim), jnp.float32),
        "w3": lin(ks[2], mid_dim, mid_dim, 1.0 / jnp.sqrt(mid_dim)),
        "b3": jnp.zeros((1, mid_dim), jnp.float32),
        # head: layer_norm(..., std=0.1) is an init-time rescale -> small weight, zero bias
        "w4": lin(ks[3], mid_dim, action_dim, 0.1 / jnp.sqrt(mid_dim)),
        "b4": jnp.zeros((1, action_dim), jnp.float32),
        # priorK ~ randn(state_dim, action_dim) * 0.01, frozen
        "priorK": jax.random.normal(ks[4], (state_dim, action_dim), jnp.float32) * 0.01,
    }


def reference_forward(state, p):
    h = jnp.tanh(state @ p["w1"] + p["b1"])
    h = jnp.tanh(h @ p["w2"] + p["b2"])
    h = jnp.tanh(h @ p["w3"] + p["b3"])
    a = h @ p["w4"] + p["b4"]
    return jnp.tanh(a) + state @ p["priorK"]


# ------------------------------------------------------------------------------ main
if __name__ == "__main__":
    key = jax.random.PRNGKey(0)
    k_param, k_state = jax.random.split(key)

    batch = 8          # small test shapes; kernel is designed for B >= 256 in production
    state_dim = 16
    mid_dim = 32
    action_dim = 4

    params = init_params(k_param, state_dim, mid_dim, action_dim)
    state = jax.random.normal(k_state, (batch, state_dim), jnp.float32)

    packed, meta = prepare_params(params)      # one-time param packing / padding / bf16 cast
    out = actor_residual_forward(state, packed, meta)
    out = jax.block_until_ready(out)

    ref = reference_forward(state, params)
    assert out.shape == (batch, action_dim)
    # bf16 MXU operands (f32 accumulate, f32 tanh) -> loosened tolerance vs. f32 reference.
    assert jnp.allclose(out, ref, atol=2e-2, rtol=1e-2), float(jnp.max(jnp.abs(out - ref)))

    print("KERNEL_OK")
</pallas_src>

<mosaic_0001>
module attributes {stable_mosaic.version = 11 : i64} {
  func.func @actor_residual_kernel(%arg0: i32, %arg1: memref<8x16xf32, #tpu.memory_space<vmem>>, %arg2: memref<16x256xbf16, #tpu.memory_space<vmem>>, %arg3: memref<1x128xf32, #tpu.memory_space<vmem>>, %arg4: memref<128x128xbf16, #tpu.memory_space<vmem>>, %arg5: memref<1x128xf32, #tpu.memory_space<vmem>>, %arg6: memref<128x128xbf16, #tpu.memory_space<vmem>>, %arg7: memref<1x128xf32, #tpu.memory_space<vmem>>, %arg8: memref<128x128xbf16, #tpu.memory_space<vmem>>, %arg9: memref<1x128xf32, #tpu.memory_space<vmem>>, %arg10: memref<8x128xf32, #tpu.memory_space<vmem>>) attributes {dimension_semantics = [#tpu.dimension_semantics<parallel>], iteration_bounds = array<i64: 1>, scalar_prefetch = 0 : i64, scratch_operands = 0 : i64, tpu.core_type = #tpu.core_type<tc>, window_params = [{transform_indices = @transform_0, window_bounds = array<i64: 8, 16>}, {pipeline_mode = #tpu.pipeline_mode<synchronous>, transform_indices = @transform_1, window_bounds = array<i64: 16, 256>}, {pipeline_mode = #tpu.pipeline_mode<synchronous>, transform_indices = @transform_2, window_bounds = array<i64: 1, 128>}, {pipeline_mode = #tpu.pipeline_mode<synchronous>, transform_indices = @transform_3, window_bounds = array<i64: 128, 128>}, {pipeline_mode = #tpu.pipeline_mode<synchronous>, transform_indices = @transform_4, window_bounds = array<i64: 1, 128>}, {pipeline_mode = #tpu.pipeline_mode<synchronous>, transform_indices = @transform_5, window_bounds = array<i64: 128, 128>}, {pipeline_mode = #tpu.pipeline_mode<synchronous>, transform_indices = @transform_6, window_bounds = array<i64: 1, 128>}, {pipeline_mode = #tpu.pipeline_mode<synchronous>, transform_indices = @transform_7, window_bounds = array<i64: 128, 128>}, {pipeline_mode = #tpu.pipeline_mode<synchronous>, transform_indices = @transform_8, window_bounds = array<i64: 1, 128>}, {transform_indices = @transform_9, window_bounds = array<i64: 8, 128>}]} {
    %c0 = arith.constant 0 : index
    %c0_0 = arith.constant 0 : index
    %0 = vector.load %arg1[%c0, %c0_0] : memref<8x16xf32, #tpu.memory_space<vmem>>, vector<8x16xf32>
    %1 = arith.truncf %0 : vector<8x16xf32> to vector<8x16xbf16>
    %c0_1 = arith.constant 0 : index
    %c0_2 = arith.constant 0 : index
    %2 = vector.load %arg2[%c0_1, %c0_2] : memref<16x256xbf16, #tpu.memory_space<vmem>>, vector<16x256xbf16>
    %cst = arith.constant dense<0.000000e+00> : vector<8x256xf32>
    %3 = tpu.matmul %1, %2, %cst {dimension_numbers = #tpu.dot_dimension_numbers<[1], [0], [0], [1], [0, 0, 1, 1], [], []>} : vector<8x16xbf16>, vector<16x256xbf16>, vector<8x256xf32> -> vector<8x256xf32>
    %4 = vector.extract_strided_slice %3 {offsets = [0, 128], sizes = [8, 128], strides = [1, 1]} : vector<8x256xf32> to vector<8x128xf32>
    %c0_3 = arith.constant 0 : index
    %c0_4 = arith.constant 0 : index
    %5 = vector.load %arg10[%c0_3, %c0_4] : memref<8x128xf32, #tpu.memory_space<vmem>>, vector<8x128xf32>
    tpu.vector_store %arg10[%c0_3, %c0_4], %4 {strides = array<i32>} : memref<8x128xf32, #tpu.memory_space<vmem>>, vector<8x128xf32>,
    %6 = vector.extract_strided_slice %3 {offsets = [0, 0], sizes = [8, 128], strides = [1, 1]} : vector<8x256xf32> to vector<8x128xf32>
    %c0_5 = arith.constant 0 : index
    %c0_6 = arith.constant 0 : index
    %7 = vector.load %arg3[%c0_5, %c0_6] : memref<1x128xf32, #tpu.memory_space<vmem>>, vector<1x128xf32>
    %8 = vector.broadcast %7 : vector<1x128xf32> to vector<8x128xf32>
    %9 = arith.addf %6, %8 : vector<8x128xf32>
    %10 = math.tanh %9 : vector<8x128xf32>
    %11 = arith.truncf %10 : vector<8x128xf32> to vector<8x128xbf16>
    %c0_7 = arith.constant 0 : index
    %c0_8 = arith.constant 0 : index
    %12 = vector.load %arg4[%c0_7, %c0_8] : memref<128x128xbf16, #tpu.memory_space<vmem>>, vector<128x128xbf16>
    %cst_9 = arith.constant dense<0.000000e+00> : vector<8x128xf32>
    %13 = tpu.matmul %11, %12, %cst_9 {dimension_numbers = #tpu.dot_dimension_numbers<[1], [0], [0], [1], [0, 0, 1, 1], [], []>} : vector<8x128xbf16>, vector<128x128xbf16>, vector<8x128xf32> -> vector<8x128xf32>
    %c0_10 = arith.constant 0 : index
    %c0_11 = arith.constant 0 : index
    %14 = vector.load %arg5[%c0_10, %c0_11] : memref<1x128xf32, #tpu.memory_space<vmem>>, vector<1x128xf32>
    %15 = vector.broadcast %14 : vector<1x128xf32> to vector<8x128xf32>
    %16 = arith.addf %13, %15 : vector<8x128xf32>
    %17 = math.tanh %16 : vector<8x128xf32>
    %18 = arith.truncf %17 : vector<8x128xf32> to vector<8x128xbf16>
    %c0_12 = arith.constant 0 : index
    %c0_13 = arith.constant 0 : index
    %19 = vector.load %arg6[%c0_12, %c0_13] : memref<128x128xbf16, #tpu.memory_space<vmem>>, vector<128x128xbf16>
    %cst_14 = arith.constant dense<0.000000e+00> : vector<8x128xf32>
    %20 = tpu.matmul %18, %19, %cst_14 {dimension_numbers = #tpu.dot_dimension_numbers<[1], [0], [0], [1], [0, 0, 1, 1], [], []>} : vector<8x128xbf16>, vector<128x128xbf16>, vector<8x128xf32> -> vector<8x128xf32>
    %c0_15 = arith.constant 0 : index
    %c0_16 = arith.constant 0 : index
    %21 = vector.load %arg7[%c0_15, %c0_16] : memref<1x128xf32, #tpu.memory_space<vmem>>, vector<1x128xf32>
    %22 = vector.broadcast %21 : vector<1x128xf32> to vector<8x128xf32>
    %23 = arith.addf %20, %22 : vector<8x128xf32>
    %24 = math.tanh %23 : vector<8x128xf32>
    %25 = arith.truncf %24 : vector<8x128xf32> to vector<8x128xbf16>
    %c0_17 = arith.constant 0 : index
    %c0_18 = arith.constant 0 : index
    %26 = vector.load %arg8[%c0_17, %c0_18] : memref<128x128xbf16, #tpu.memory_space<vmem>>, vector<128x128xbf16>
    %cst_19 = arith.constant dense<0.000000e+00> : vector<8x128xf32>
    %27 = tpu.matmul %25, %26, %cst_19 {dimension_numbers = #tpu.dot_dimension_numbers<[1], [0], [0], [1], [0, 0, 1, 1], [], []>} : vector<8x128xbf16>, vector<128x128xbf16>, vector<8x128xf32> -> vector<8x128xf32>
    %c0_20 = arith.constant 0 : index
    %c0_21 = arith.constant 0 : index
    %28 = vector.load %arg9[%c0_20, %c0_21] : memref<1x128xf32, #tpu.memory_space<vmem>>, vector<1x128xf32>
    %29 = vector.broadcast %28 : vector<1x128xf32> to vector<8x128xf32>
    %30 = arith.addf %27, %29 : vector<8x128xf32>
    %c0_22 = arith.constant 0 : index
    %c0_23 = arith.constant 0 : index
    %31 = vector.load %arg10[%c0_22, %c0_23] : memref<8x128xf32, #tpu.memory_space<vmem>>, vector<8x128xf32>
    %32 = math.tanh %30 : vector<8x128xf32>
    %33 = arith.addf %31, %32 : vector<8x128xf32>
    %c0_24 = arith.constant 0 : index
    %c0_25 = arith.constant 0 : index
    %34 = vector.load %arg10[%c0_24, %c0_25] : memref<8x128xf32, #tpu.memory_space<vmem>>, vector<8x128xf32>
    tpu.vector_store %arg10[%c0_24, %c0_25], %33 {strides = array<i32>} : memref<8x128xf32, #tpu.memory_space<vmem>>, vector<8x128xf32>,
    return
  }
  func.func @transform_0(%arg0: i32) -> (i32, i32) {
    %c0_i32 = arith.constant 0 : i32
    %c0_i32_0 = arith.constant 0 : i32
    return %arg0, %c0_i32 : i32, i32
  }
  func.func @transform_1(%arg0: i32) -> (i32, i32) {
    %c0_i32 = arith.constant 0 : i32
    %c0_i32_0 = arith.constant 0 : i32
    %c0_i32_1 = arith.constant 0 : i32
    return %c0_i32, %c0_i32_0 : i32, i32
  }
  func.func @transform_2(%arg0: i32) -> (i32, i32) {
    %c0_i32 = arith.constant 0 : i32
    %c0_i32_0 = arith.constant 0 : i32
    %c0_i32_1 = arith.constant 0 : i32
    return %c0_i32, %c0_i32_0 : i32, i32
  }
  func.func @transform_3(%arg0: i32) -> (i32, i32) {
    %c0_i32 = arith.constant 0 : i32
    %c0_i32_0 = arith.constant 0 : i32
    %c0_i32_1 = arith.constant 0 : i32
    return %c0_i32, %c0_i32_0 : i32, i32
  }
  func.func @transform_4(%arg0: i32) -> (i32, i32) {
    %c0_i32 = arith.constant 0 : i32
    %c0_i32_0 = arith.constant 0 : i32
    %c0_i32_1 = arith.constant 0 : i32
    return %c0_i32, %c0_i32_0 : i32, i32
  }
  func.func @transform_5(%arg0: i32) -> (i32, i32) {
    %c0_i32 = arith.constant 0 : i32
    %c0_i32_0 = arith.constant 0 : i32
    %c0_i32_1 = arith.constant 0 : i32
    return %c0_i32, %c0_i32_0 : i32, i32
  }
  func.func @transform_6(%arg0: i32) -> (i32, i32) {
    %c0_i32 = arith.constant 0 : i32
    %c0_i32_0 = arith.constant 0 : i32
    %c0_i32_1 = arith.constant 0 : i32
    return %c0_i32, %c0_i32_0 : i32, i32
  }
  func.func @transform_7(%arg0: i32) -> (i32, i32) {
    %c0_i32 = arith.constant 0 : i32
    %c0_i32_0 = arith.constant 0 : i32
    %c0_i32_1 = arith.constant 0 : i32
    return %c0_i32, %c0_i32_0 : i32, i32
  }
  func.func @transform_8(%arg0: i32) -> (i32, i32) {
    %c0_i32 = arith.constant 0 : i32
    %c0_i32_0 = arith.constant 0 : i32
    %c0_i32_1 = arith.constant 0 : i32
    return %c0_i32, %c0_i32_0 : i32, i32
  }
  func.func @transform_9(%arg0: i32) -> (i32, i32) {
    %c0_i32 = arith.constant 0 : i32
    %c0_i32_0 = arith.constant 0 : i32
    return %arg0, %c0_i32 : i32, i32
  }
}

</mosaic_0001>

<llo_original>
// kernel: tpu_custom_call.1
$region0: #{tpu_custom_call.1}
  #allocation0 [shape = 'u32[]', space=smem, size = 0x4, offset = 0x4, fixed_abs, tag = 'smem constant byte address 0x4 - core index']
  #allocation1 [shape = 'u32[144,128]{1,0:T(1,128)}', space=vmem, size = 0x12000, scoped, tag = 'internal scratch']
  %s0 = inlined_call_operand.hbm [shape: f32[8,16], index: 0, kind: input, shape index: {}]
  %s1 = inlined_call_operand.hbm [shape: bf16[16,256], index: 1, kind: input, shape index: {}]
  %s2 = inlined_call_operand.vmem [shape: f32[1,128], index: 2, kind: input, shape index: {}]
  %s3 = inlined_call_operand.hbm [shape: bf16[128,128], index: 3, kind: input, shape index: {}]
  %s4 = inlined_call_operand.vmem [shape: f32[1,128], index: 4, kind: input, shape index: {}]
  %s5 = inlined_call_operand.hbm [shape: bf16[128,128], index: 5, kind: input, shape index: {}]
  %s6 = inlined_call_operand.vmem [shape: f32[1,128], index: 6, kind: input, shape index: {}]
  %s7 = inlined_call_operand.hbm [shape: bf16[128,128], index: 7, kind: input, shape index: {}]
  %s8 = inlined_call_operand.vmem [shape: f32[1,128], index: 8, kind: input, shape index: {}]
  %s9 = inlined_call_operand.hbm [shape: f32[8,128], index: 9, kind: output, shape index: {}]
  %s10 = sld [smem:[#allocation0]]
  $region66: #{tpu_custom_call.1} parent=0
    _
  %s12 = ssub.s32 1, %s10
  %s13 = scalar_select 0, %s12, %s10
  $region1: #{tpu_custom_call.1} parent=0
    #allocation2 [shape = 'u8[4096]{0}', space=vmem, size = 0x1000, scoped, tag = 'input window, operand 0, single buffered']
    #allocation3 [shape = 's32[1]{0}', space=sflag, size = 0x4, scoped, tag = 'scoped memory for tpu_custom_call.1']
    #allocation4 [shape = 's32[1]{0}', space=sflag, size = 0x4, scoped, tag = 'scoped memory for tpu_custom_call.1']
    #allocation5 [shape = 'u8[8192]{0}', space=vmem, size = 0x2000, scoped, tag = 'input window, operand 1, single buffered']
    #allocation6 [shape = 's32[1]{0}', space=sflag, size = 0x4, scoped, tag = 'scoped memory for tpu_custom_call.1']
    #allocation7 [shape = 'u8[32768]{0}', space=vmem, size = 0x8000, scoped, tag = 'input window, operand 3, single buffered']
    #allocation8 [shape = 'u8[32768]{0}', space=vmem, size = 0x8000, scoped, tag = 'input window, operand 5, single buffered']
    #allocation9 [shape = 's32[1]{0}', space=sflag, size = 0x4, scoped, tag = 'scoped memory for tpu_custom_call.1']
    #allocation10 [shape = 'u8[32768]{0}', space=vmem, size = 0x8000, scoped, tag = 'input window, operand 7, single buffered']
    #allocation11 [shape = 'u8[4096]{0}', space=vmem, size = 0x1000, scoped, tag = 'output window, operand 0, single buffered']
    %14 = vsyncpa [#allocation3], 0
    %15 = vsyncpa [#allocation6], 0
    %16 = vsyncpa [#allocation9], 0
    %17 = vsyncpa [#allocation4], 0
    // Predicated region
    $region2: #{tpu_custom_call.1} parent=1 // pred_check
      _
    $region3: #{tpu_custom_call.1} parent=1 // pred_check_branch
      %19 = sbr.rel (0) target = $region5
    $region4: #{tpu_custom_call.1} parent=1 // pred_region
      %s21 = ssub.s32 128, 128
      %22 = vsyncadd [#allocation3], %s21
      %s24 = sshll.u32 [#allocation2], 4
      %s25 = int_to_ptr.vmem [resolvable:$true] %s24
      %27 = dma.hbm_to_vmem [thread:$0]  %s0, 128, %s25, [#allocation3]
    $region5: #{tpu_custom_call.1} parent=1 // pred_fallthru
      _
    // Predicated region
    $region6: #{tpu_custom_call.1} parent=1 // pred_check
      _
    $region7: #{tpu_custom_call.1} parent=1 // pred_check_branch
      %29 = sbr.rel (0) target = $region9
    $region8: #{tpu_custom_call.1} parent=1 // pred_region
      %s31 = ssub.s32 256, 256
      %32 = vsyncadd [#allocation6], %s31
      %s33 = sshll.u32 [#allocation5], 4
      %s34 = int_to_ptr.vmem [resolvable:$true] %s33
      %39 = dma.hbm_to_vmem [thread:$0]  %s1, 256, %s34, [#allocation6], 128, 128, 8
    $region9: #{tpu_custom_call.1} parent=1 // pred_fallthru
      _
    // Predicated region
    $region10: #{tpu_custom_call.1} parent=1 // pred_check
      _
    $region11: #{tpu_custom_call.1} parent=1 // pred_check_branch
      %41 = sbr.rel (0) target = $region13
    $region12: #{tpu_custom_call.1} parent=1 // pred_region
      _
    $region13: #{tpu_custom_call.1} parent=1 // pred_fallthru
      _
    // Predicated region
    $region14: #{tpu_custom_call.1} parent=1 // pred_check
      _
    $region15: #{tpu_custom_call.1} parent=1 // pred_check_branch
      %43 = sbr.rel (0) target = $region17
    $region16: #{tpu_custom_call.1} parent=1 // pred_region
      %s45 = ssub.s32 1024, 1024
      %46 = vsyncadd [#allocation6], %s45
      %s47 = sshll.u32 [#allocation7], 4
      %s48 = int_to_ptr.vmem [resolvable:$true] %s47
      %53 = dma.hbm_to_vmem [thread:$0]  %s3, 1024, %s48, [#allocation6], 64, 64, 4
    $region17: #{tpu_custom_call.1} parent=1 // pred_fallthru
      _
    // Predicated region
    $region18: #{tpu_custom_call.1} parent=1 // pred_check
      _
    $region19: #{tpu_custom_call.1} parent=1 // pred_check_branch
      %55 = sbr.rel (0) target = $region21
    $region20: #{tpu_custom_call.1} parent=1 // pred_region
      _
    $region21: #{tpu_custom_call.1} parent=1 // pred_fallthru
      _
    // Predicated region
    $region22: #{tpu_custom_call.1} parent=1 // pred_check
      _
    $region23: #{tpu_custom_call.1} parent=1 // pred_check_branch
      %57 = sbr.rel (0) target = $region25
    $region24: #{tpu_custom_call.1} parent=1 // pred_region
      %s59 = ssub.s32 1024, 1024
      %60 = vsyncadd [#allocation9], %s59
      %s61 = sshll.u32 [#allocation8], 4
      %s62 = int_to_ptr.vmem [resolvable:$true] %s61
      %67 = dma.hbm_to_vmem [thread:$0]  %s5, 1024, %s62, [#allocation9], 64, 64, 4
    $region25: #{tpu_custom_call.1} parent=1 // pred_fallthru
      _
    // Predicated region
    $region26: #{tpu_custom_call.1} parent=1 // pred_check
      _
    $region27: #{tpu_custom_call.1} parent=1 // pred_check_branch
      %69 = sbr.rel (0) target = $region29
    $region28: #{tpu_custom_call.1} parent=1 // pred_region
      _
    $region29: #{tpu_custom_call.1} parent=1 // pred_fallthru
      _
    // Predicated region
    $region30: #{tpu_custom_call.1} parent=1 // pred_check
      _
    $region31: #{tpu_custom_call.1} parent=1 // pred_check_branch
      %71 = sbr.rel (0) target = $region33
    $region32: #{tpu_custom_call.1} parent=1 // pred_region
      %s73 = ssub.s32 1024, 1024
      %74 = vsyncadd [#allocation9], %s73
      %s75 = sshll.u32 [#allocation10], 4
      %s76 = int_to_ptr.vmem [resolvable:$true] %s75
      %81 = dma.hbm_to_vmem [thread:$0]  %s7, 1024, %s76, [#allocation9], 64, 64, 4
    $region33: #{tpu_custom_call.1} parent=1 // pred_fallthru
      _
    // Predicated region
    $region34: #{tpu_custom_call.1} parent=1 // pred_check
      _
    $region35: #{tpu_custom_call.1} parent=1 // pred_check_branch
      %83 = sbr.rel (0) target = $region37
    $region36: #{tpu_custom_call.1} parent=1 // pred_region
      _
    $region37: #{tpu_custom_call.1} parent=1 // pred_fallthru
      _
    // Predicated region
    $region38: #{tpu_custom_call.1} parent=1 // pred_check
      _
    $region39: #{tpu_custom_call.1} parent=1 // pred_check_branch
      %85 = sbr.rel (0) target = $region41
    $region40: #{tpu_custom_call.1} parent=1 // pred_region
      %86 = dma.done [#allocation3], 128
    $region41: #{tpu_custom_call.1} parent=1 // pred_fallthru
      _
    // Predicated region
    $region42: #{tpu_custom_call.1} parent=1 // pred_check
      _
    $region43: #{tpu_custom_call.1} parent=1 // pred_check_branch
      %88 = sbr.rel (0) target = $region45
    $region44: #{tpu_custom_call.1} parent=1 // pred_region
      %89 = dma.done [#allocation6], 256
    $region45: #{tpu_custom_call.1} parent=1 // pred_fallthru
      _
    // Predicated region
    $region46: #{tpu_custom_call.1} parent=1 // pred_check
      _
    $region47: #{tpu_custom_call.1} parent=1 // pred_check_branch
      %91 = sbr.rel (0) target = $region49
    $region48: #{tpu_custom_call.1} parent=1 // pred_region
      %92 = dma.done [#allocation6], 1024
    $region49: #{tpu_custom_call.1} parent=1 // pred_fallthru
      _
    // Predicated region
    $region50: #{tpu_custom_call.1} parent=1 // pred_check
      _
    $region51: #{tpu_custom_call.1} parent=1 // pred_check_branch
      %94 = sbr.rel (0) target = $region53
    $region52: #{tpu_custom_call.1} parent=1 // pred_region
      %95 = dma.done [#allocation9], 1024
    $region53: #{tpu_custom_call.1} parent=1 // pred_fallthru
      _
    // Predicated region
    $region54: #{tpu_custom_call.1} parent=1 // pred_check
      _
    $region55: #{tpu_custom_call.1} parent=1 // pred_check_branch
      %97 = sbr.rel (0) target = $region57
    $region56: #{tpu_custom_call.1} parent=1 // pred_region
      %98 = dma.done [#allocation9], 1024
    $region57: #{tpu_custom_call.1} parent=1 // pred_fallthru
      _
    %v100 = vld [vmem:[#allocation2] sm:$0xff]
    %v101 = vpack.c.bf16 %v100, %v100
    %v102 = vld [vmem:[#allocation5] sm:$0xff]
    %v103 = vld [vmem:[#allocation5 + $0x8] sm:$0xff]
    %v106 = vunpack.c.l.b16 %v102
    %v107 = vunpack.c.h.b16 %v102
    %v108 = vunpack.c.l.b16 %v103
    %v109 = vunpack.c.h.b16 %v103
    %v110 = vpack.c.b16 %v108, %v106
    %v111 = vpack.c.b16 %v109, %v107
    %vm114 = vcmask 130048
    %v116 = vsel %vm114, %v101, 0
    %118 = vmatprep.subr.bf16.mxu0 %v111
    %119 = vmatpush1.bf16.msra.mxu0 %v110
    %120 = vmatprep.subr.bf16.mxu0 0
    %121 = vmatpush1.bf16.msra.mxu0 0
    %122 = vmatprep.subr.bf16.mxu0 0
    %123 = vmatpush1.bf16.msra.mxu0 0
    %124 = vmatprep.subr.bf16.mxu0 0
    %125 = vmatpush1.bf16.msra.mxu0 0
    %126 = vmatprep.subr.bf16.mxu0 0
    %127 = vmatpush1.bf16.msra.mxu0 0
    %128 = vmatprep.subr.bf16.mxu0 0
    %129 = vmatpush1.bf16.msra.mxu0 0
    %130 = vmatprep.subr.bf16.mxu0 0
    %131 = vmatpush1.bf16.msra.mxu0 0
    %132 = vmatprep.subr.bf16.mxu0 0
    %133 = vmatpush1.bf16.msra.mxu0 0
    %134 = vmatprep.subr.bf16.mxu0 0
    %135 = vmatpush1.bf16.msra.mxu0 0
    %136 = vmatprep.subr.bf16.mxu0 0
    %137 = vmatpush1.bf16.msra.mxu0 0
    %138 = vmatprep.subr.bf16.mxu0 0
    %139 = vmatpush1.bf16.msra.mxu0 0
    %140 = vmatprep.subr.bf16.mxu0 0
    %141 = vmatpush1.bf16.msra.mxu0 0
    %142 = vmatprep.subr.bf16.mxu0 0
    %143 = vmatpush1.bf16.msra.mxu0 0
    %144 = vmatprep.subr.bf16.mxu0 0
    %145 = vmatpush1.bf16.msra.mxu0 0
    %146 = vmatprep.subr.bf16.mxu0 0
    %147 = vmatpush1.bf16.msra.mxu0 0
    %148 = vmatprep.subr.bf16.mxu0 0
    %149 = vmatpush1.bf16.msra.mxu0 0
    %150 = vmatprep.mubr.bf16.mxu0 0
    %151 = vmatmul.mubr.bf16.gmra.mrb[0].mxu0 %v116
    %v152 = vpop.f32.mrb[0].mxu0
    %v153 = vadd.f32 0.0, %v152
    %v154 = vpop.f32.mrb[0].mxu0
    %v155 = vadd.f32 0.0, %v154
    %v156 = vpop.f32.mrb[0].mxu0
    %v157 = vpop.f32.mrb[0].mxu0
    %158 = vdwg.mxu0
    %159 = vst [vmem:[#allocation11] sm:$0xff] %v155
    %v160 = vld [vmem:[%s2] sm:$0x1]
    %v162 = vlaneseq
    %v163 = vshrl.u32 %v162, 7
    %v164 = vsub.s32 0, %v163
    %v165 = vrot.slane %v160, %v164
    %v167 = vadd.f32 %v153, %v165
    %v168 = vtanh.pop %v167
    %v169 = vpack.c.bf16 %v168, %v168
    %v170 = vld [vmem:[#allocation7] sm:$0xf]
    %v171 = vld [vmem:[#allocation7 + $0x4] sm:$0xf]
    %v172 = vld [vmem:[#allocation7 + $0x8] sm:$0xf]
    %v173 = vld [vmem:[#allocation7 + $0xc] sm:$0xf]
    %v174 = vld [vmem:[#allocation7 + $0x10] sm:$0xf]
    %v175 = vld [vmem:[#allocation7 + $0x14] sm:$0xf]
    %v176 = vld [vmem:[#allocation7 + $0x18] sm:$0xf]
    %v177 = vld [vmem:[#allocation7 + $0x1c] sm:$0xf]
    %v178 = vld [vmem:[#allocation7 + $0x20] sm:$0xf]
    %v179 = vld [vmem:[#allocation7 + $0x24] sm:$0xf]
    %v180 = vld [vmem:[#allocation7 + $0x28] sm:$0xf]
    %v181 = vld [vmem:[#allocation7 + $0x2c] sm:$0xf]
    %v182 = vld [vmem:[#allocation7 + $0x30] sm:$0xf]
    %v183 = vld [vmem:[#allocation7 + $0x34] sm:$0xf]
    %v184 = vld [vmem:[#allocation7 + $0x38] sm:$0xf]
    %v185 = vld [vmem:[#allocation7 + $0x3c] sm:$0xf]
    %v186 = vld [vmem:[%s4] sm:$0x1]
    %v188 = vlaneseq
    %v189 = vshrl.u32 %v188, 7
    %v190 = vsub.s32 0, %v189
    %v191 = vrot.slane %v186, %v190
    %v209 = vunpack.c.l.b16 %v170
    %v210 = vunpack.c.l.b16 %v171
    %v211 = vunpack.c.l.b16 %v172
    %v212 = vunpack.c.l.b16 %v173
    %v213 = vunpack.c.l.b16 %v174
    %v214 = vunpack.c.l.b16 %v175
    %v215 = vunpack.c.l.b16 %v176
    %v216 = vunpack.c.l.b16 %v177
    %v217 = vunpack.c.l.b16 %v178
    %v218 = vunpack.c.l.b16 %v179
    %v219 = vunpack.c.l.b16 %v180
    %v220 = vunpack.c.l.b16 %v181
    %v221 = vunpack.c.l.b16 %v182
    %v222 = vunpack.c.l.b16 %v183
    %v223 = vunpack.c.l.b16 %v184
    %v224 = vunpack.c.l.b16 %v185
    %v225 = vpack.c.b16 %v210, %v209
    %v226 = vpack.c.b16 %v212, %v211
    %v227 = vpack.c.b16 %v214, %v213
    %v228 = vpack.c.b16 %v216, %v215
    %v229 = vpack.c.b16 %v218, %v217
    %v230 = vpack.c.b16 %v220, %v219
    %v231 = vpack.c.b16 %v222, %v221
    %v232 = vpack.c.b16 %v224, %v223
    %241 = vmatprep.subr.bf16.mxu0 0
    %242 = vmatpush1.bf16.msra.mxu0 %v225
    %243 = vmatprep.subr.bf16.mxu0 0
    %244 = vmatpush1.bf16.msra.mxu0 %v226
    %245 = vmatprep.subr.bf16.mxu0 0
    %246 = vmatpush1.bf16.msra.mxu0 %v227
    %247 = vmatprep.subr.bf16.mxu0 0
    %248 = vmatpush1.bf16.msra.mxu0 %v228
    %249 = vmatprep.subr.bf16.mxu0 0
    %250 = vmatpush1.bf16.msra.mxu0 %v229
    %251 = vmatprep.subr.bf16.mxu0 0
    %252 = vmatpush1.bf16.msra.mxu0 %v230
    %253 = vmatprep.subr.bf16.mxu0 0
    %254 = vmatpush1.bf16.msra.mxu0 %v231
    %255 = vmatprep.subr.bf16.mxu0 0
    %256 = vmatpush1.bf16.msra.mxu0 %v232
    %257 = vmatprep.subr.bf16.mxu0 0
    %258 = vmatpush1.bf16.msra.mxu0 0
    %259 = vmatprep.subr.bf16.mxu0 0
    %260 = vmatpush1.bf16.msra.mxu0 0
    %261 = vmatprep.subr.bf16.mxu0 0
    %262 = vmatpush1.bf16.msra.mxu0 0
    %263 = vmatprep.subr.bf16.mxu0 0
    %264 = vmatpush1.bf16.msra.mxu0 0
    %265 = vmatprep.subr.bf16.mxu0 0
    %266 = vmatpush1.bf16.msra.mxu0 0
    %267 = vmatprep.subr.bf16.mxu0 0
    %268 = vmatpush1.bf16.msra.mxu0 0
    %269 = vmatprep.subr.bf16.mxu0 0
    %270 = vmatpush1.bf16.msra.mxu0 0
    %271 = vmatprep.subr.bf16.mxu0 0
    %272 = vmatpush1.bf16.msra.mxu0 0
    %273 = vmatprep.mubr.bf16.mxu0 0
    %274 = vmatmul.mubr.bf16.gmra.mrb[0].mxu0 %v169
    %v275 = vpop.f32.mrb[0].mxu0
    %v276 = vadd.f32 %v191, %v275
    %v277 = vpop.f32.mrb[0].mxu0
    %v278 = vpop.f32.mrb[0].mxu0
    %v279 = vpop.f32.mrb[0].mxu0
    %280 = vdwg.mxu0
    %v281 = vtanh.pop %v276
    %v282 = vpack.c.bf16 %v281, %v281
    %v283 = vld [vmem:[#allocation8] sm:$0xf]
    %v284 = vld [vmem:[#allocation8 + $0x4] sm:$0xf]
    %v285 = vld [vmem:[#allocation8 + $0x8] sm:$0xf]
    %v286 = vld [vmem:[#allocation8 + $0xc] sm:$0xf]
    %v287 = vld [vmem:[#allocation8 + $0x10] sm:$0xf]
    %v288 = vld [vmem:[#allocation8 + $0x14] sm:$0xf]
    %v289 = vld [vmem:[#allocation8 + $0x18] sm:$0xf]
    %v290 = vld [vmem:[#allocation8 + $0x1c] sm:$0xf]
    %v291 = vld [vmem:[#allocation8 + $0x20] sm:$0xf]
    %v292 = vld [vmem:[#allocation8 + $0x24] sm:$0xf]
    %v293 = vld [vmem:[#allocation8 + $0x28] sm:$0xf]
    %v294 = vld [vmem:[#allocation8 + $0x2c] sm:$0xf]
    %v295 = vld [vmem:[#allocation8 + $0x30] sm:$0xf]
    %v296 = vld [vmem:[#allocation8 + $0x34] sm:$0xf]
    %v297 = vld [vmem:[#allocation8 + $0x38] sm:$0xf]
    %v298 = vld [vmem:[#allocation8 + $0x3c] sm:$0xf]
    %v299 = vld [vmem:[%s6] sm:$0x1]
    %v301 = vlaneseq
    %v302 = vshrl.u32 %v301, 7
    %v303 = vsub.s32 0, %v302
    %v304 = vrot.slane %v299, %v303
    %v322 = vunpack.c.l.b16 %v283
    %v323 = vunpack.c.l.b16 %v284
    %v324 = vunpack.c.l.b16 %v285
    %v325 = vunpack.c.l.b16 %v286
    %v326 = vunpack.c.l.b16 %v287
    %v327 = vunpack.c.l.b16 %v288
    %v328 = vunpack.c.l.b16 %v289
    %v329 = vunpack.c.l.b16 %v290
    %v330 = vunpack.c.l.b16 %v291
    %v331 = vunpack.c.l.b16 %v292
    %v332 = vunpack.c.l.b16 %v293
    %v333 = vunpack.c.l.b16 %v294
    %v334 = vunpack.c.l.b16 %v295
    %v335 = vunpack.c.l.b16 %v296
    %v336 = vunpack.c.l.b16 %v297
    %v337 = vunpack.c.l.b16 %v298
    %v338 = vpack.c.b16 %v323, %v322
    %v339 = vpack.c.b16 %v325, %v324
    %v340 = vpack.c.b16 %v327, %v326
    %v341 = vpack.c.b16 %v329, %v328
    %v342 = vpack.c.b16 %v331, %v330
    %v343 = vpack.c.b16 %v333, %v332
    %v344 = vpack.c.b16 %v335, %v334
    %v345 = vpack.c.b16 %v337, %v336
    %354 = vmatprep.subr.bf16.mxu0 0
    %355 = vmatpush1.bf16.msra.mxu0 %v338
    %356 = vmatprep.subr.bf16.mxu0 0
    %357 = vmatpush1.bf16.msra.mxu0 %v339
    %358 = vmatprep.subr.bf16.mxu0 0
    %359 = vmatpush1.bf16.msra.mxu0 %v340
    %360 = vmatprep.subr.bf16.mxu0 0
    %361 = vmatpush1.bf16.msra.mxu0 %v341
    %362 = vmatprep.subr.bf16.mxu0 0
    %363 = vmatpush1.bf16.msra.mxu0 %v342
    %364 = vmatprep.subr.bf16.mxu0 0
    %365 = vmatpush1.bf16.msra.mxu0 %v343
    %366 = vmatprep.subr.bf16.mxu0 0
    %367 = vmatpush1.bf16.msra.mxu0 %v344
    %368 = vmatprep.subr.bf16.mxu0 0
    %369 = vmatpush1.bf16.msra.mxu0 %v345
    %370 = vmatprep.subr.bf16.mxu0 0
    %371 = vmatpush1.bf16.msra.mxu0 0
    %372 = vmatprep.subr.bf16.mxu0 0
    %373 = vmatpush1.bf16.msra.mxu0 0
    %374 = vmatprep.subr.bf16.mxu0 0
    %375 = vmatpush1.bf16.msra.mxu0 0
    %376 = vmatprep.subr.bf16.mxu0 0
    %377 = vmatpush1.bf16.msra.mxu0 0
    %378 = vmatprep.subr.bf16.mxu0 0
    %379 = vmatpush1.bf16.msra.mxu0 0
    %380 = vmatprep.subr.bf16.mxu0 0
    %381 = vmatpush1.bf16.msra.mxu0 0
    %382 = vmatprep.subr.bf16.mxu0 0
    %383 = vmatpush1.bf16.msra.mxu0 0
    %384 = vmatprep.subr.bf16.mxu0 0
    %385 = vmatpush1.bf16.msra.mxu0 0
    %386 = vmatprep.mubr.bf16.mxu0 0
    %387 = vmatmul.mubr.bf16.gmra.mrb[0].mxu0 %v282
    %v388 = vpop.f32.mrb[0].mxu0
    %v389 = vadd.f32 %v304, %v388
    %v390 = vpop.f32.mrb[0].mxu0
    %v391 = vpop.f32.mrb[0].mxu0
    %v392 = vpop.f32.mrb[0].mxu0
    %393 = vdwg.mxu0
    %v394 = vtanh.pop %v389
    %v395 = vpack.c.bf16 %v394, %v394
    %v396 = vld [vmem:[#allocation10] sm:$0xf]
    %v397 = vld [vmem:[#allocation10 + $0x4] sm:$0xf]
    %v398 = vld [vmem:[#allocation10 + $0x8] sm:$0xf]
    %v399 = vld [vmem:[#allocation10 + $0xc] sm:$0xf]
    %v400 = vld [vmem:[#allocation10 + $0x10] sm:$0xf]
    %v401 = vld [vmem:[#allocation10 + $0x14] sm:$0xf]
    %v402 = vld [vmem:[#allocation10 + $0x18] sm:$0xf]
    %v403 = vld [vmem:[#allocation10 + $0x1c] sm:$0xf]
    %v404 = vld [vmem:[#allocation10 + $0x20] sm:$0xf]
    %v405 = vld [vmem:[#allocation10 + $0x24] sm:$0xf]
    %v406 = vld [vmem:[#allocation10 + $0x28] sm:$0xf]
    %v407 = vld [vmem:[#allocation10 + $0x2c] sm:$0xf]
    %v408 = vld [vmem:[#allocation10 + $0x30] sm:$0xf]
    %v409 = vld [vmem:[#allocation10 + $0x34] sm:$0xf]
    %v410 = vld [vmem:[#allocation10 + $0x38] sm:$0xf]
    %v411 = vld [vmem:[#allocation10 + $0x3c] sm:$0xf]
    %v412 = vld [vmem:[%s8] sm:$0x1]
    %v414 = vlaneseq
    %v415 = vshrl.u32 %v414, 7
    %v416 = vsub.s32 0, %v415
    %v417 = vrot.slane %v412, %v416
    %v435 = vunpack.c.l.b16 %v396
    %v436 = vunpack.c.l.b16 %v397
    %v437 = vunpack.c.l.b16 %v398
    %v438 = vunpack.c.l.b16 %v399
    %v439 = vunpack.c.l.b16 %v400
    %v440 = vunpack.c.l.b16 %v401
    %v441 = vunpack.c.l.b16 %v402
    %v442 = vunpack.c.l.b16 %v403
    %v443 = vunpack.c.l.b16 %v404
    %v444 = vunpack.c.l.b16 %v405
    %v445 = vunpack.c.l.b16 %v406
    %v446 = vunpack.c.l.b16 %v407
    %v447 = vunpack.c.l.b16 %v408
    %v448 = vunpack.c.l.b16 %v409
    %v449 = vunpack.c.l.b16 %v410
    %v450 = vunpack.c.l.b16 %v411
    %v451 = vpack.c.b16 %v436, %v435
    %v452 = vpack.c.b16 %v438, %v437
    %v453 = vpack.c.b16 %v440, %v439
    %v454 = vpack.c.b16 %v442, %v441
    %v455 = vpack.c.b16 %v444, %v443
    %v456 = vpack.c.b16 %v446, %v445
    %v457 = vpack.c.b16 %v448, %v447
    %v458 = vpack.c.b16 %v450, %v449
    %467 = vmatprep.subr.bf16.mxu0 0
    %468 = vmatpush1.bf16.msra.mxu0 %v451
    %469 = vmatprep.subr.bf16.mxu0 0
    %470 = vmatpush1.bf16.msra.mxu0 %v452
    %471 = vmatprep.subr.bf16.mxu0 0
    %472 = vmatpush1.bf16.msra.mxu0 %v453
    %473 = vmatprep.subr.bf16.mxu0 0
    %474 = vmatpush1.bf16.msra.mxu0 %v454
    %475 = vmatprep.subr.bf16.mxu0 0
    %476 = vmatpush1.bf16.msra.mxu0 %v455
    %477 = vmatprep.subr.bf16.mxu0 0
    %478 = vmatpush1.bf16.msra.mxu0 %v456
    %479 = vmatprep.subr.bf16.mxu0 0
    %480 = vmatpush1.bf16.msra.mxu0 %v457
    %481 = vmatprep.subr.bf16.mxu0 0
    %482 = vmatpush1.bf16.msra.mxu0 %v458
    %483 = vmatprep.subr.bf16.mxu0 0
    %484 = vmatpush1.bf16.msra.mxu0 0
    %485 = vmatprep.subr.bf16.mxu0 0
    %486 = vmatpush1.bf16.msra.mxu0 0
    %487 = vmatprep.subr.bf16.mxu0 0
    %488 = vmatpush1.bf16.msra.mxu0 0
    %489 = vmatprep.subr.bf16.mxu0 0
    %490 = vmatpush1.bf16.msra.mxu0 0
    %491 = vmatprep.subr.bf16.mxu0 0
    %492 = vmatpush1.bf16.msra.mxu0 0
    %493 = vmatprep.subr.bf16.mxu0 0
    %494 = vmatpush1.bf16.msra.mxu0 0
    %495 = vmatprep.subr.bf16.mxu0 0
    %496 = vmatpush1.bf16.msra.mxu0 0
    %497 = vmatprep.subr.bf16.mxu0 0
    %498 = vmatpush1.bf16.msra.mxu0 0
    %499 = vmatprep.mubr.bf16.mxu0 0
    %500 = vmatmul.mubr.bf16.gmra.mrb[0].mxu0 %v395
    %v501 = vpop.f32.mrb[0].mxu0
    %v502 = vadd.f32 %v417, %v501
    %v503 = vpop.f32.mrb[0].mxu0
    %v504 = vpop.f32.mrb[0].mxu0
    %v505 = vpop.f32.mrb[0].mxu0
    %506 = vdwg.mxu0
    %v507 = vld [vmem:[#allocation11] sm:$0xff]
    %v508 = vtanh.pop %v502
    %v509 = vadd.f32 %v507, %v508
    %510 = vst [vmem:[#allocation11] sm:$0xff] %v509
    // Predicated region
    $region58: #{tpu_custom_call.1} parent=1 // pred_check
      _
    $region59: #{tpu_custom_call.1} parent=1 // pred_check_branch
      %512 = sbr.rel (0) target = $region61
    $region60: #{tpu_custom_call.1} parent=1 // pred_region
      %s514 = ssub.s32 128, 128
      %515 = vsyncadd [#allocation4], %s514
      %s517 = sshll.u32 [#allocation11], 4
      %s518 = int_to_ptr.vmem [resolvable:$true] %s517
      %520 = dma.vmem_to_hbm [thread:$0]  %s518, 128, %s9, [#allocation4]
    $region61: #{tpu_custom_call.1} parent=1 // pred_fallthru
      _
    // Predicated region
    $region62: #{tpu_custom_call.1} parent=1 // pred_check
      _
    $region63: #{tpu_custom_call.1} parent=1 // pred_check_branch
      %522 = sbr.rel (0) target = $region65
    $region64: #{tpu_custom_call.1} parent=1 // pred_region
      %523 = dma.done [#allocation4], 128
    $region65: #{tpu_custom_call.1} parent=1 // pred_fallthru
      _
    %524 = vsyncpa [#allocation3], 1
    %525 = vsyncpa [#allocation6], 1
    %526 = vsyncpa [#allocation9], 1
    %527 = vsyncpa [#allocation4], 1

</llo_original>
